<compile_context>
chip_gen: v7x
topology: tpu7x:2x2x1
jax: 0.10.0
libtpu: 0.0.40
codegen_flags: <defaults>
</compile_context>

<pallas_src>
import functools

import jax
import jax.numpy as jnp
from jax.experimental import pallas as pl
from jax.experimental.pallas import tpu as pltpu

IN_DIM = 784          # pads to 896 lanes (7 x 128) in VMEM — accounted for below
IN_DIM_PAD = 896
HID_DIM = 128
OUT_DIM = 10
OUT_PAD = 128         # pad second-layer N to 128 -> unmasked lane-dense stores


def mlp_kernel(x_ref, w1_ref, b1_ref, w2_ref, b2_ref, o_ref):
    # x arrives f32 straight from HBM; cast to bf16 in-kernel (no separate
    # wrapper cast pass over x).
    x = x_ref[...].astype(jnp.bfloat16)
    # Layer 1: (TILE_B, 784)bf16 @ (784, 128)bf16 -> f32 accum, + bias, ReLU.
    h = jnp.dot(x, w1_ref[...], preferred_element_type=jnp.float32)
    h = jnp.maximum(h + b1_ref[...], 0.0)
    # Layer 2: (TILE_B, 128)bf16 @ (128, 128)bf16 -> f32 accum, + bias.
    out = jnp.dot(h.astype(jnp.bfloat16), w2_ref[...],
                  preferred_element_type=jnp.float32)
    o_ref[...] = (out + b2_ref[...]).astype(o_ref.dtype)   # bf16 writeback


def _round_up(n, m):
    return (n + m - 1) // m * m


def _default_tile_b():
    """Pick the biggest batch tile that comfortably fits the chip's VMEM:
    8192 rows on 128 MiB chips (v5e/v6e), 2048 on 64 MiB-per-TC v7x."""
    try:
        vmem = int(getattr(pltpu.get_tpu_info(), "vmem_capacity_bytes", 64 << 20))
        return 8192 if vmem >= (100 << 20) else 2048
    except Exception:
        return 2048


def _vmem_budget(tile_b):
    # Double-buffered f32 x tile + double-buffered bf16 out tile + resident
    # weights, plus headroom for in-kernel intermediates (h in f32/bf16).
    need = (2 * tile_b * IN_DIM_PAD * 4          # x tiles (f32, K padded to 896)
            + 2 * tile_b * OUT_PAD * 2           # out tiles (bf16)
            + (IN_DIM_PAD * HID_DIM + HID_DIM * OUT_PAD) * 2   # bf16 weights
            + 4 * (HID_DIM + OUT_PAD))           # f32 biases
    return need + (16 << 20)


def pack_params(w1, b1, w2, b2):
    """One-time weight prep (hoisted off the per-call path): bf16 weights,
    second layer padded to 128 output lanes. Weights are (in, out) = torch W.T."""
    w1b = w1.astype(jnp.bfloat16)
    b1f = jnp.asarray(b1, jnp.float32).reshape(1, HID_DIM)
    w2p = jnp.zeros((HID_DIM, OUT_PAD), jnp.bfloat16).at[:, :OUT_DIM].set(
        w2.astype(jnp.bfloat16))
    b2p = jnp.zeros((1, OUT_PAD), jnp.float32).at[:, :OUT_DIM].set(
        jnp.asarray(b2, jnp.float32).reshape(1, OUT_DIM))
    return w1b, b1f, w2p, b2p


@functools.partial(jax.jit, static_argnames=("tile_b",))
def net_forward(x, w1b, b1f, w2p, b2p, *, tile_b=None):
    """relu(x @ w1 + b1) @ w2 + b2 with pre-packed params (see pack_params)."""
    B = x.shape[0]
    if tile_b is None:
        tile_b = _default_tile_b()

    # >= 2 grid steps when possible so ("parallel",) shards the batch across
    # both TensorCores on v7x; 16-row rounding keeps sublane-friendly blocks.
    TILE_B = min(tile_b, max(16, _round_up(-(-B // 2), 16)))
    grid = (pl.cdiv(B, TILE_B),)   # ragged last block handled by Pallas, no jnp.pad pass

    flops = 2 * B * IN_DIM * HID_DIM + 2 * B * HID_DIM * OUT_PAD
    bytes_accessed = (x.size * 4 + w1b.size * 2 + b1f.size * 4
                      + w2p.size * 2 + b2p.size * 4 + B * OUT_PAD * 2)

    out = pl.pallas_call(
        mlp_kernel,
        out_shape=jax.ShapeDtypeStruct((B, OUT_PAD), jnp.bfloat16),
        grid=grid,
        in_specs=[
            pl.BlockSpec((TILE_B, IN_DIM), lambda i: (i, 0)),    # x tile (pipelined, f32)
            pl.BlockSpec((IN_DIM, HID_DIM), lambda i: (0, 0)),   # w1 (resident)
            pl.BlockSpec((1, HID_DIM), lambda i: (0, 0)),        # b1 (resident)
            pl.BlockSpec((HID_DIM, OUT_PAD), lambda i: (0, 0)),  # w2 (resident)
            pl.BlockSpec((1, OUT_PAD), lambda i: (0, 0)),        # b2 (resident)
        ],
        out_specs=pl.BlockSpec((TILE_B, OUT_PAD), lambda i: (i, 0)),
        compiler_params=pltpu.CompilerParams(
            dimension_semantics=("parallel",),       # megacore / v7x 2-TC sharding
            vmem_limit_bytes=_vmem_budget(TILE_B),   # tile-derived, keeps 2x buffering
        ),
        cost_estimate=pl.CostEstimate(
            flops=flops, transcendentals=0, bytes_accessed=bytes_accessed),
    )(x, w1b, b1f, w2p, b2p)

    # Only 10 of the 128 lanes are real logits; slice is tiny, cast back to f32
    # to match the torch module's output dtype.
    return out[:, :OUT_DIM].astype(jnp.float32)


def init_params(key):
    # Mimic torch.nn.Linear default init: U(-1/sqrt(fan_in), 1/sqrt(fan_in)).
    k1, k2, k3, k4 = jax.random.split(key, 4)
    bound1 = 1.0 / jnp.sqrt(IN_DIM)
    bound2 = 1.0 / jnp.sqrt(HID_DIM)
    w1 = jax.random.uniform(k1, (IN_DIM, HID_DIM), jnp.float32, -bound1, bound1)
    b1 = jax.random.uniform(k2, (1, HID_DIM), jnp.float32, -bound1, bound1)
    w2 = jax.random.uniform(k3, (HID_DIM, OUT_DIM), jnp.float32, -bound2, bound2)
    b2 = jax.random.uniform(k4, (1, OUT_DIM), jnp.float32, -bound2, bound2)
    return w1, b1, w2, b2


if __name__ == "__main__":
    key = jax.random.PRNGKey(0)
    kx, kp = jax.random.split(key)
    B = 8
    x = jax.random.normal(kx, (B, IN_DIM), jnp.float32)
    w1, b1, w2, b2 = init_params(kp)
    w1b, b1f, w2p, b2p = pack_params(w1, b1, w2, b2)   # one-time, off the hot path

    out = net_forward(x, w1b, b1f, w2p, b2p)
    out = jax.block_until_ready(out)

    # Pure-JAX f32 reference; kernel uses bf16 matmul operands (f32 accumulation)
    # and a bf16 writeback, so the tolerance is loosened accordingly.
    ref = jnp.maximum(x @ w1 + b1, 0.0) @ w2 + b2
    assert out.shape == (B, OUT_DIM)
    assert jnp.allclose(out, ref, atol=3e-2, rtol=3e-2)

    print("KERNEL_OK")
</pallas_src>

<mosaic_0001>
module attributes {stable_mosaic.version = 11 : i64} {
  func.func @mlp_kernel(%arg0: i32, %arg1: memref<16x784xf32, #tpu.memory_space<vmem>>, %arg2: memref<784x128xbf16, #tpu.memory_space<vmem>>, %arg3: memref<1x128xf32, #tpu.memory_space<vmem>>, %arg4: memref<128x128xbf16, #tpu.memory_space<vmem>>, %arg5: memref<1x128xf32, #tpu.memory_space<vmem>>, %arg6: memref<16x128xbf16, #tpu.memory_space<vmem>>) attributes {dimension_semantics = [#tpu.dimension_semantics<parallel>], iteration_bounds = array<i64: 1>, scalar_prefetch = 0 : i64, scratch_operands = 0 : i64, tpu.core_type = #tpu.core_type<tc>, window_params = [{transform_indices = @transform_0, window_bounds = array<i64: 16, 784>}, {pipeline_mode = #tpu.pipeline_mode<synchronous>, transform_indices = @transform_1, window_bounds = array<i64: 784, 128>}, {pipeline_mode = #tpu.pipeline_mode<synchronous>, transform_indices = @transform_2, window_bounds = array<i64: 1, 128>}, {pipeline_mode = #tpu.pipeline_mode<synchronous>, transform_indices = @transform_3, window_bounds = array<i64: 128, 128>}, {pipeline_mode = #tpu.pipeline_mode<synchronous>, transform_indices = @transform_4, window_bounds = array<i64: 1, 128>}, {transform_indices = @transform_5, window_bounds = array<i64: 16, 128>}]} {
    %c0 = arith.constant 0 : index
    %c0_0 = arith.constant 0 : index
    %0 = vector.load %arg1[%c0, %c0_0] : memref<16x784xf32, #tpu.memory_space<vmem>>, vector<16x784xf32>
    %1 = arith.truncf %0 : vector<16x784xf32> to vector<16x784xbf16>
    %c0_1 = arith.constant 0 : index
    %c0_2 = arith.constant 0 : index
    %2 = vector.load %arg2[%c0_1, %c0_2] : memref<784x128xbf16, #tpu.memory_space<vmem>>, vector<784x128xbf16>
    %cst = arith.constant dense<0.000000e+00> : vector<16x128xf32>
    %3 = tpu.matmul %1, %2, %cst {dimension_numbers = #tpu.dot_dimension_numbers<[1], [0], [0], [1], [0, 0, 1, 1], [], []>} : vector<16x784xbf16>, vector<784x128xbf16>, vector<16x128xf32> -> vector<16x128xf32>
    %c0_3 = arith.constant 0 : index
    %c0_4 = arith.constant 0 : index
    %4 = vector.load %arg3[%c0_3, %c0_4] : memref<1x128xf32, #tpu.memory_space<vmem>>, vector<1x128xf32>
    %5 = vector.broadcast %4 : vector<1x128xf32> to vector<16x128xf32>
    %6 = arith.addf %3, %5 : vector<16x128xf32>
    %cst_5 = arith.constant 0.000000e+00 : f32
    %7 = vector.broadcast %cst_5 : f32 to vector<16x128xf32>
    %8 = arith.maximumf %6, %7 : vector<16x128xf32>
    %9 = arith.truncf %8 : vector<16x128xf32> to vector<16x128xbf16>
    %c0_6 = arith.constant 0 : index
    %c0_7 = arith.constant 0 : index
    %10 = vector.load %arg4[%c0_6, %c0_7] : memref<128x128xbf16, #tpu.memory_space<vmem>>, vector<128x128xbf16>
    %cst_8 = arith.constant dense<0.000000e+00> : vector<16x128xf32>
    %11 = tpu.matmul %9, %10, %cst_8 {dimension_numbers = #tpu.dot_dimension_numbers<[1], [0], [0], [1], [0, 0, 1, 1], [], []>} : vector<16x128xbf16>, vector<128x128xbf16>, vector<16x128xf32> -> vector<16x128xf32>
    %c0_9 = arith.constant 0 : index
    %c0_10 = arith.constant 0 : index
    %12 = vector.load %arg5[%c0_9, %c0_10] : memref<1x128xf32, #tpu.memory_space<vmem>>, vector<1x128xf32>
    %13 = vector.broadcast %12 : vector<1x128xf32> to vector<16x128xf32>
    %14 = arith.addf %11, %13 : vector<16x128xf32>
    %15 = arith.truncf %14 : vector<16x128xf32> to vector<16x128xbf16>
    %c0_11 = arith.constant 0 : index
    %c0_12 = arith.constant 0 : index
    %16 = vector.load %arg6[%c0_11, %c0_12] : memref<16x128xbf16, #tpu.memory_space<vmem>>, vector<16x128xbf16>
    tpu.vector_store %arg6[%c0_11, %c0_12], %15 {strides = array<i32>} : memref<16x128xbf16, #tpu.memory_space<vmem>>, vector<16x128xbf16>,
    return
  }
  func.func @transform_0(%arg0: i32) -> (i32, i32) {
    %c0_i32 = arith.constant 0 : i32
    %c0_i32_0 = arith.constant 0 : i32
    return %arg0, %c0_i32 : i32, i32
  }
  func.func @transform_1(%arg0: i32) -> (i32, i32) {
    %c0_i32 = arith.constant 0 : i32
    %c0_i32_0 = arith.constant 0 : i32
    %c0_i32_1 = arith.constant 0 : i32
    return %c0_i32, %c0_i32_0 : i32, i32
  }
  func.func @transform_2(%arg0: i32) -> (i32, i32) {
    %c0_i32 = arith.constant 0 : i32
    %c0_i32_0 = arith.constant 0 : i32
    %c0_i32_1 = arith.constant 0 : i32
    return %c0_i32, %c0_i32_0 : i32, i32
  }
  func.func @transform_3(%arg0: i32) -> (i32, i32) {
    %c0_i32 = arith.constant 0 : i32
    %c0_i32_0 = arith.constant 0 : i32
    %c0_i32_1 = arith.constant 0 : i32
    return %c0_i32, %c0_i32_0 : i32, i32
  }
  func.func @transform_4(%arg0: i32) -> (i32, i32) {
    %c0_i32 = arith.constant 0 : i32
    %c0_i32_0 = arith.constant 0 : i32
    %c0_i32_1 = arith.constant 0 : i32
    return %c0_i32, %c0_i32_0 : i32, i32
  }
  func.func @transform_5(%arg0: i32) -> (i32, i32) {
    %c0_i32 = arith.constant 0 : i32
    %c0_i32_0 = arith.constant 0 : i32
    return %arg0, %c0_i32 : i32, i32
  }
}

</mosaic_0001>

<llo_original>
// kernel: net_forward.1
$region0: #{net_forward.1}
  #allocation0 [shape = 'u32[]', space=smem, size = 0x4, offset = 0x4, fixed_abs, tag = 'smem constant byte address 0x4 - core index']
  #allocation1 [shape = 'u32[144,128]{1,0:T(1,128)}', space=vmem, size = 0x12000, scoped, tag = 'internal scratch']
  %s0 = inlined_call_operand.hbm [shape: f32[8,784], index: 0, kind: input, shape index: {}]
  %s1 = inlined_call_operand.hbm [shape: bf16[784,128], index: 1, kind: input, shape index: {}]
  %s2 = inlined_call_operand.vmem [shape: f32[1,128], index: 2, kind: input, shape index: {}]
  %s3 = inlined_call_operand.hbm [shape: bf16[128,128], index: 3, kind: input, shape index: {}]
  %s4 = inlined_call_operand.vmem [shape: f32[1,128], index: 4, kind: input, shape index: {}]
  %s5 = inlined_call_operand.vmem [shape: bf16[8,128], index: 5, kind: output, shape index: {}]
  %s6 = sld [smem:[#allocation0]]
  $region72: #{net_forward.1} parent=0
    _
  %s8 = ssub.s32 1, %s6
  %s9 = scalar_select 0, %s8, %s6
  $region1: #{net_forward.1} parent=0
    #allocation2 [shape = 'u8[57344]{0}', space=vmem, size = 0xe000, scoped, tag = 'input window, operand 0, single buffered']
    #allocation3 [shape = 's32[1]{0}', space=sflag, size = 0x4, scoped, tag = 'scoped memory for net_forward.1']
    #allocation4 [shape = 'u8[200704]{0}', space=vmem, size = 0x31000, scoped, tag = 'input window, operand 1, single buffered']
    #allocation5 [shape = 's32[1]{0}', space=sflag, size = 0x4, scoped, tag = 'scoped memory for net_forward.1']
    #allocation6 [shape = 'u8[32768]{0}', space=vmem, size = 0x8000, scoped, tag = 'input window, operand 3, single buffered']
    #allocation7 [shape = 'u8[4096]{0}', space=vmem, size = 0x1000, scoped, tag = 'output window, operand 0, single buffered']
    %10 = vsyncpa [#allocation3], 0
    %11 = vsyncpa [#allocation5], 0
    // Predicated region
    $region2: #{net_forward.1} parent=1 // pred_check
      _
    $region3: #{net_forward.1} parent=1 // pred_check_branch
      %13 = sbr.rel (0) target = $region5
    $region4: #{net_forward.1} parent=1 // pred_region
      %s15 = ssub.s32 1792, 896
      %16 = vsyncadd [#allocation3], %s15
      %s17 = sshll.u32 [#allocation2], 4
      %s18 = int_to_ptr.vmem [resolvable:$true] %s17
      %23 = dma.hbm_to_vmem [thread:$0]  %s0, 896, %s18, [#allocation3], 896, 896, 56
    $region5: #{net_forward.1} parent=1 // pred_fallthru
      _
    // Predicated region
    $region6: #{net_forward.1} parent=1 // pred_check
      _
    $region7: #{net_forward.1} parent=1 // pred_check_branch
      %25 = sbr.rel (0) target = $region9
    $region8: #{net_forward.1} parent=1 // pred_region
      %s27 = ssub.s32 6272, 6272
      %28 = vsyncadd [#allocation5], %s27
      %s29 = sshll.u32 [#allocation4], 4
      %s30 = int_to_ptr.vmem [resolvable:$true] %s29
      %35 = dma.hbm_to_vmem [thread:$0]  %s1, 6272, %s30, [#allocation5], 64, 64, 4
    $region9: #{net_forward.1} parent=1 // pred_fallthru
      _
    // Predicated region
    $region10: #{net_forward.1} parent=1 // pred_check
      _
    $region11: #{net_forward.1} parent=1 // pred_check_branch
      %37 = sbr.rel (0) target = $region13
    $region12: #{net_forward.1} parent=1 // pred_region
      _
    $region13: #{net_forward.1} parent=1 // pred_fallthru
      _
    // Predicated region
    $region14: #{net_forward.1} parent=1 // pred_check
      _
    $region15: #{net_forward.1} parent=1 // pred_check_branch
      %39 = sbr.rel (0) target = $region17
    $region16: #{net_forward.1} parent=1 // pred_region
      %s41 = ssub.s32 1024, 1024
      %42 = vsyncadd [#allocation5], %s41
      %s43 = sshll.u32 [#allocation6], 4
      %s44 = int_to_ptr.vmem [resolvable:$true] %s43
      %49 = dma.hbm_to_vmem [thread:$0]  %s3, 1024, %s44, [#allocation5], 64, 64, 4
    $region17: #{net_forward.1} parent=1 // pred_fallthru
      _
    // Predicated region
    $region18: #{net_forward.1} parent=1 // pred_check
      _
    $region19: #{net_forward.1} parent=1 // pred_check_branch
      %51 = sbr.rel (0) target = $region21
    $region20: #{net_forward.1} parent=1 // pred_region
      _
    $region21: #{net_forward.1} parent=1 // pred_fallthru
      _
    // Predicated region
    $region22: #{net_forward.1} parent=1 // pred_check
      _
    $region23: #{net_forward.1} parent=1 // pred_check_branch
      %53 = sbr.rel (0) target = $region25
    $region24: #{net_forward.1} parent=1 // pred_region
      %54 = dma.done [#allocation3], 1792
    $region25: #{net_forward.1} parent=1 // pred_fallthru
      _
    // Predicated region
    $region26: #{net_forward.1} parent=1 // pred_check
      _
    $region27: #{net_forward.1} parent=1 // pred_check_branch
      %56 = sbr.rel (0) target = $region29
    $region28: #{net_forward.1} parent=1 // pred_region
      %57 = dma.done [#allocation5], 6272
    $region29: #{net_forward.1} parent=1 // pred_fallthru
      _
    // Predicated region
    $region30: #{net_forward.1} parent=1 // pred_check
      _
    $region31: #{net_forward.1} parent=1 // pred_check_branch
      %59 = sbr.rel (0) target = $region33
    $region32: #{net_forward.1} parent=1 // pred_region
      %60 = dma.done [#allocation5], 1024
    $region33: #{net_forward.1} parent=1 // pred_fallthru
      _
    %v62 = vld [vmem:[#allocation2] sm:$0xff]
    %v63 = vld [vmem:[#allocation2 + $0x8] sm:$0xff]
    %v64 = vld [vmem:[#allocation2 + $0x10] sm:$0xff]
    %v65 = vld [vmem:[#allocation2 + $0x18] sm:$0xff]
    %v66 = vld [vmem:[#allocation2 + $0x20] sm:$0xff]
    %v67 = vld [vmem:[#allocation2 + $0x28] sm:$0xff]
    %v68 = vld [vmem:[#allocation2 + $0x30] sm:$0xff]
    %v69 = vld [vmem:[#allocation2 + $0x38] sm:$0xff]
    %v70 = vld [vmem:[#allocation2 + $0x40] sm:$0xff]
    %v71 = vld [vmem:[#allocation2 + $0x48] sm:$0xff]
    %v72 = vld [vmem:[#allocation2 + $0x50] sm:$0xff]
    %v73 = vld [vmem:[#allocation2 + $0x58] sm:$0xff]
    %v74 = vld [vmem:[#allocation2 + $0x60] sm:$0xff]
    %v75 = vld [vmem:[#allocation2 + $0x68] sm:$0xff]
    %v76 = vpack.c.bf16 %v69, %v62
    %v77 = vpack.c.bf16 %v70, %v63
    %v78 = vpack.c.bf16 %v71, %v64
    %v79 = vpack.c.bf16 %v72, %v65
    %v80 = vpack.c.bf16 %v73, %v66
    %v81 = vpack.c.bf16 %v74, %v67
    %v82 = vpack.c.bf16 %v75, %v68
    %v83 = vld [vmem:[#allocation4] sm:$0xf]
    %v84 = vld [vmem:[#allocation4 + $0x4] sm:$0xf]
    %v85 = vld [vmem:[#allocation4 + $0x8] sm:$0xf]
    %v86 = vld [vmem:[#allocation4 + $0xc] sm:$0xf]
    %v87 = vld [vmem:[#allocation4 + $0x10] sm:$0xf]
    %v88 = vld [vmem:[#allocation4 + $0x14] sm:$0xf]
    %v89 = vld [vmem:[#allocation4 + $0x18] sm:$0xf]
    %v90 = vld [vmem:[#allocation4 + $0x1c] sm:$0xf]
    %v91 = vld [vmem:[#allocation4 + $0x20] sm:$0xf]
    %v92 = vld [vmem:[#allocation4 + $0x24] sm:$0xf]
    %v93 = vld [vmem:[#allocation4 + $0x28] sm:$0xf]
    %v94 = vld [vmem:[#allocation4 + $0x2c] sm:$0xf]
    %v95 = vld [vmem:[#allocation4 + $0x30] sm:$0xf]
    %v96 = vld [vmem:[#allocation4 + $0x34] sm:$0xf]
    %v97 = vld [vmem:[#allocation4 + $0x38] sm:$0xf]
    %v98 = vld [vmem:[#allocation4 + $0x3c] sm:$0xf]
    %v99 = vld [vmem:[#allocation4 + $0x40] sm:$0xf]
    %v100 = vld [vmem:[#allocation4 + $0x44] sm:$0xf]
    %v101 = vld [vmem:[#allocation4 + $0x48] sm:$0xf]
    %v102 = vld [vmem:[#allocation4 + $0x4c] sm:$0xf]
    %v103 = vld [vmem:[#allocation4 + $0x50] sm:$0xf]
    %v104 = vld [vmem:[#allocation4 + $0x54] sm:$0xf]
    %v105 = vld [vmem:[#allocation4 + $0x58] sm:$0xf]
    %v106 = vld [vmem:[#allocation4 + $0x5c] sm:$0xf]
    %v107 = vld [vmem:[#allocation4 + $0x60] sm:$0xf]
    %v108 = vld [vmem:[#allocation4 + $0x64] sm:$0xf]
    %v109 = vld [vmem:[#allocation4 + $0x68] sm:$0xf]
    %v110 = vld [vmem:[#allocation4 + $0x6c] sm:$0xf]
    %v111 = vld [vmem:[#allocation4 + $0x70] sm:$0xf]
    %v112 = vld [vmem:[#allocation4 + $0x74] sm:$0xf]
    %v113 = vld [vmem:[#allocation4 + $0x78] sm:$0xf]
    %v114 = vld [vmem:[#allocation4 + $0x7c] sm:$0xf]
    %v115 = vld [vmem:[#allocation4 + $0x80] sm:$0xf]
    %v116 = vld [vmem:[#allocation4 + $0x84] sm:$0xf]
    %v117 = vld [vmem:[#allocation4 + $0x88] sm:$0xf]
    %v118 = vld [vmem:[#allocation4 + $0x8c] sm:$0xf]
    %v119 = vld [vmem:[#allocation4 + $0x90] sm:$0xf]
    %v120 = vld [vmem:[#allocation4 + $0x94] sm:$0xf]
    %v121 = vld [vmem:[#allocation4 + $0x98] sm:$0xf]
    %v122 = vld [vmem:[#allocation4 + $0x9c] sm:$0xf]
    %v123 = vld [vmem:[#allocation4 + $0xa0] sm:$0xf]
    %v124 = vld [vmem:[#allocation4 + $0xa4] sm:$0xf]
    %v125 = vld [vmem:[#allocation4 + $0xa8] sm:$0xf]
    %v126 = vld [vmem:[#allocation4 + $0xac] sm:$0xf]
    %v127 = vld [vmem:[#allocation4 + $0xb0] sm:$0xf]
    %v128 = vld [vmem:[#allocation4 + $0xb4] sm:$0xf]
    %v129 = vld [vmem:[#allocation4 + $0xb8] sm:$0xf]
    %v130 = vld [vmem:[#allocation4 + $0xbc] sm:$0xf]
    %v131 = vld [vmem:[#allocation4 + $0xc0] sm:$0xf]
    %v132 = vld [vmem:[#allocation4 + $0xc4] sm:$0xf]
    %v133 = vld [vmem:[#allocation4 + $0xc8] sm:$0xf]
    %v134 = vld [vmem:[#allocation4 + $0xcc] sm:$0xf]
    %v135 = vld [vmem:[#allocation4 + $0xd0] sm:$0xf]
    %v136 = vld [vmem:[#allocation4 + $0xd4] sm:$0xf]
    %v137 = vld [vmem:[#allocation4 + $0xd8] sm:$0xf]
    %v138 = vld [vmem:[#allocation4 + $0xdc] sm:$0xf]
    %v139 = vld [vmem:[#allocation4 + $0xe0] sm:$0xf]
    %v140 = vld [vmem:[#allocation4 + $0xe4] sm:$0xf]
    %v141 = vld [vmem:[#allocation4 + $0xe8] sm:$0xf]
    %v142 = vld [vmem:[#allocation4 + $0xec] sm:$0xf]
    %v143 = vld [vmem:[#allocation4 + $0xf0] sm:$0xf]
    %v144 = vld [vmem:[#allocation4 + $0xf4] sm:$0xf]
    %v145 = vld [vmem:[#allocation4 + $0xf8] sm:$0xf]
    %v146 = vld [vmem:[#allocation4 + $0xfc] sm:$0xf]
    %v147 = vld [vmem:[#allocation4 + $0x100] sm:$0xf]
    %v148 = vld [vmem:[#allocation4 + $0x104] sm:$0xf]
    %v149 = vld [vmem:[#allocation4 + $0x108] sm:$0xf]
    %v150 = vld [vmem:[#allocation4 + $0x10c] sm:$0xf]
    %v151 = vld [vmem:[#allocation4 + $0x110] sm:$0xf]
    %v152 = vld [vmem:[#allocation4 + $0x114] sm:$0xf]
    %v153 = vld [vmem:[#allocation4 + $0x118] sm:$0xf]
    %v154 = vld [vmem:[#allocation4 + $0x11c] sm:$0xf]
    %v155 = vld [vmem:[#allocation4 + $0x120] sm:$0xf]
    %v156 = vld [vmem:[#allocation4 + $0x124] sm:$0xf]
    %v157 = vld [vmem:[#allocation4 + $0x128] sm:$0xf]
    %v158 = vld [vmem:[#allocation4 + $0x12c] sm:$0xf]
    %v159 = vld [vmem:[#allocation4 + $0x130] sm:$0xf]
    %v160 = vld [vmem:[#allocation4 + $0x134] sm:$0xf]
    %v161 = vld [vmem:[#allocation4 + $0x138] sm:$0xf]
    %v162 = vld [vmem:[#allocation4 + $0x13c] sm:$0xf]
    %v163 = vld [vmem:[#allocation4 + $0x140] sm:$0xf]
    %v164 = vld [vmem:[#allocation4 + $0x144] sm:$0xf]
    %v165 = vld [vmem:[#allocation4 + $0x148] sm:$0xf]
    %v166 = vld [vmem:[#allocation4 + $0x14c] sm:$0xf]
    %v167 = vld [vmem:[#allocation4 + $0x150] sm:$0xf]
    %v168 = vld [vmem:[#allocation4 + $0x154] sm:$0xf]
    %v169 = vld [vmem:[#allocation4 + $0x158] sm:$0xf]
    %v170 = vld [vmem:[#allocation4 + $0x15c] sm:$0xf]
    %v171 = vld [vmem:[#allocation4 + $0x160] sm:$0xf]
    %v172 = vld [vmem:[#allocation4 + $0x164] sm:$0xf]
    %v173 = vld [vmem:[#allocation4 + $0x168] sm:$0xf]
    %v174 = vld [vmem:[#allocation4 + $0x16c] sm:$0xf]
    %v175 = vld [vmem:[#allocation4 + $0x170] sm:$0xf]
    %v176 = vld [vmem:[#allocation4 + $0x174] sm:$0xf]
    %v177 = vld [vmem:[#allocation4 + $0x178] sm:$0xf]
    %v178 = vld [vmem:[#allocation4 + $0x17c] sm:$0xf]
    %v179 = vld [vmem:[#allocation4 + $0x180] sm:$0xf]
    %v180 = vld [vmem:[#allocation4 + $0x184] sm:$0xf]
    %v181 = vld [vmem:[%s2] sm:$0x1]
    %v183 = vlaneseq
    %v184 = vshrl.u32 %v183, 7
    %v185 = vsub.s32 0, %v184
    %v186 = vrot.slane %v181, %v185
    %v286 = vunpack.c.l.b16 %v83
    %v287 = vunpack.c.l.b16 %v84
    %v288 = vunpack.c.l.b16 %v85
    %v289 = vunpack.c.l.b16 %v86
    %v290 = vunpack.c.l.b16 %v87
    %v291 = vunpack.c.l.b16 %v88
    %v292 = vunpack.c.l.b16 %v89
    %v293 = vunpack.c.l.b16 %v90
    %v294 = vunpack.c.l.b16 %v91
    %v295 = vunpack.c.l.b16 %v92
    %v296 = vunpack.c.l.b16 %v93
    %v297 = vunpack.c.l.b16 %v94
    %v298 = vunpack.c.l.b16 %v95
    %v299 = vunpack.c.l.b16 %v96
    %v300 = vunpack.c.l.b16 %v97
    %v301 = vunpack.c.l.b16 %v98
    %v302 = vunpack.c.l.b16 %v99
    %v303 = vunpack.c.l.b16 %v100
    %v304 = vunpack.c.l.b16 %v101
    %v305 = vunpack.c.l.b16 %v102
    %v306 = vunpack.c.l.b16 %v103
    %v307 = vunpack.c.l.b16 %v104
    %v308 = vunpack.c.l.b16 %v105
    %v309 = vunpack.c.l.b16 %v106
    %v310 = vunpack.c.l.b16 %v107
    %v311 = vunpack.c.l.b16 %v108
    %v312 = vunpack.c.l.b16 %v109
    %v313 = vunpack.c.l.b16 %v110
    %v314 = vunpack.c.l.b16 %v111
    %v315 = vunpack.c.l.b16 %v112
    %v316 = vunpack.c.l.b16 %v113
    %v317 = vunpack.c.l.b16 %v114
    %v318 = vunpack.c.l.b16 %v115
    %v319 = vunpack.c.l.b16 %v116
    %v320 = vunpack.c.l.b16 %v117
    %v321 = vunpack.c.l.b16 %v118
    %v322 = vunpack.c.l.b16 %v119
    %v323 = vunpack.c.l.b16 %v120
    %v324 = vunpack.c.l.b16 %v121
    %v325 = vunpack.c.l.b16 %v122
    %v326 = vunpack.c.l.b16 %v123
    %v327 = vunpack.c.l.b16 %v124
    %v328 = vunpack.c.l.b16 %v125
    %v329 = vunpack.c.l.b16 %v126
    %v330 = vunpack.c.l.b16 %v127
    %v331 = vunpack.c.l.b16 %v128
    %v332 = vunpack.c.l.b16 %v129
    %v333 = vunpack.c.l.b16 %v130
    %v334 = vunpack.c.l.b16 %v131
    %v335 = vunpack.c.l.b16 %v132
    %v336 = vunpack.c.l.b16 %v133
    %v337 = vunpack.c.l.b16 %v134
    %v338 = vunpack.c.l.b16 %v135
    %v339 = vunpack.c.l.b16 %v136
    %v340 = vunpack.c.l.b16 %v137
    %v341 = vunpack.c.l.b16 %v138
    %v342 = vunpack.c.l.b16 %v139
    %v343 = vunpack.c.l.b16 %v140
    %v344 = vunpack.c.l.b16 %v141
    %v345 = vunpack.c.l.b16 %v142
    %v346 = vunpack.c.l.b16 %v143
    %v347 = vunpack.c.l.b16 %v144
    %v348 = vunpack.c.l.b16 %v145
    %v349 = vunpack.c.l.b16 %v146
    %v350 = vunpack.c.l.b16 %v147
    %v351 = vunpack.c.l.b16 %v148
    %v352 = vunpack.c.l.b16 %v149
    %v353 = vunpack.c.l.b16 %v150
    %v354 = vunpack.c.l.b16 %v151
    %v355 = vunpack.c.l.b16 %v152
    %v356 = vunpack.c.l.b16 %v153
    %v357 = vunpack.c.l.b16 %v154
    %v358 = vunpack.c.l.b16 %v155
    %v359 = vunpack.c.l.b16 %v156
    %v360 = vunpack.c.l.b16 %v157
    %v361 = vunpack.c.l.b16 %v158
    %v362 = vunpack.c.l.b16 %v159
    %v363 = vunpack.c.l.b16 %v160
    %v364 = vunpack.c.l.b16 %v161
    %v365 = vunpack.c.l.b16 %v162
    %v366 = vunpack.c.l.b16 %v163
    %v367 = vunpack.c.l.b16 %v164
    %v368 = vunpack.c.l.b16 %v165
    %v369 = vunpack.c.l.b16 %v166
    %v370 = vunpack.c.l.b16 %v167
    %v371 = vunpack.c.l.b16 %v168
    %v372 = vunpack.c.l.b16 %v169
    %v373 = vunpack.c.l.b16 %v170
    %v374 = vunpack.c.l.b16 %v171
    %v375 = vunpack.c.l.b16 %v172
    %v376 = vunpack.c.l.b16 %v173
    %v377 = vunpack.c.l.b16 %v174
    %v378 = vunpack.c.l.b16 %v175
    %v379 = vunpack.c.l.b16 %v176
    %v380 = vunpack.c.l.b16 %v177
    %v381 = vunpack.c.l.b16 %v178
    %v382 = vunpack.c.l.b16 %v179
    %v383 = vunpack.c.l.b16 %v180
    %v384 = vpack.c.b16 %v287, %v286
    %v385 = vpack.c.b16 %v289, %v288
    %v386 = vpack.c.b16 %v291, %v290
    %v387 = vpack.c.b16 %v293, %v292
    %v388 = vpack.c.b16 %v295, %v294
    %v389 = vpack.c.b16 %v297, %v296
    %v390 = vpack.c.b16 %v299, %v298
    %v391 = vpack.c.b16 %v301, %v300
    %v392 = vpack.c.b16 %v303, %v302
    %v393 = vpack.c.b16 %v305, %v304
    %v394 = vpack.c.b16 %v307, %v306
    %v395 = vpack.c.b16 %v309, %v308
    %v396 = vpack.c.b16 %v311, %v310
    %v397 = vpack.c.b16 %v313, %v312
    %v398 = vpack.c.b16 %v315, %v314
    %v399 = vpack.c.b16 %v317, %v316
    %v400 = vpack.c.b16 %v319, %v318
    %v401 = vpack.c.b16 %v321, %v320
    %v402 = vpack.c.b16 %v323, %v322
    %v403 = vpack.c.b16 %v325, %v324
    %v404 = vpack.c.b16 %v327, %v326
    %v405 = vpack.c.b16 %v329, %v328
    %v406 = vpack.c.b16 %v331, %v330
    %v407 = vpack.c.b16 %v333, %v332
    %v408 = vpack.c.b16 %v335, %v334
    %v409 = vpack.c.b16 %v337, %v336
    %v410 = vpack.c.b16 %v339, %v338
    %v411 = vpack.c.b16 %v341, %v340
    %v412 = vpack.c.b16 %v343, %v342
    %v413 = vpack.c.b16 %v345, %v344
    %v414 = vpack.c.b16 %v347, %v346
    %v415 = vpack.c.b16 %v349, %v348
    %v416 = vpack.c.b16 %v351, %v350
    %v417 = vpack.c.b16 %v353, %v352
    %v418 = vpack.c.b16 %v355, %v354
    %v419 = vpack.c.b16 %v357, %v356
    %v420 = vpack.c.b16 %v359, %v358
    %v421 = vpack.c.b16 %v361, %v360
    %v422 = vpack.c.b16 %v363, %v362
    %v423 = vpack.c.b16 %v365, %v364
    %v424 = vpack.c.b16 %v367, %v366
    %v425 = vpack.c.b16 %v369, %v368
    %v426 = vpack.c.b16 %v371, %v370
    %v427 = vpack.c.b16 %v373, %v372
    %v428 = vpack.c.b16 %v375, %v374
    %v429 = vpack.c.b16 %v377, %v376
    %v430 = vpack.c.b16 %v379, %v378
    %v431 = vpack.c.b16 %v381, %v380
    %v432 = vpack.c.b16 %v383, %v382
    %vm482 = vcmask 130048
    %v484 = vsel %vm482, %v82, 0
    %486 = vmatprep.subr.bf16.mxu0 0
    %487 = vmatpush1.bf16.msra.mxu0 %v384
    %488 = vmatprep.subr.bf16.mxu0 0
    %489 = vmatpush1.bf16.msra.mxu0 %v385
    %490 = vmatprep.subr.bf16.mxu0 0
    %491 = vmatpush1.bf16.msra.mxu0 %v386
    %492 = vmatprep.subr.bf16.mxu0 0
    %493 = vmatpush1.bf16.msra.mxu0 %v387
    %494 = vmatprep.subr.bf16.mxu0 0
    %495 = vmatpush1.bf16.msra.mxu0 %v388
    %496 = vmatprep.subr.bf16.mxu0 0
    %497 = vmatpush1.bf16.msra.mxu0 %v389
    %498 = vmatprep.subr.bf16.mxu0 0
    %499 = vmatpush1.bf16.msra.mxu0 %v390
    %500 = vmatprep.subr.bf16.mxu0 0
    %501 = vmatpush1.bf16.msra.mxu0 %v391
    %502 = vmatprep.subr.bf16.mxu0 0
    %503 = vmatpush1.bf16.msra.mxu0 %v392
    %504 = vmatprep.subr.bf16.mxu0 0
    %505 = vmatpush1.bf16.msra.mxu0 %v393
    %506 = vmatprep.subr.bf16.mxu0 0
    %507 = vmatpush1.bf16.msra.mxu0 %v394
    %508 = vmatprep.subr.bf16.mxu0 0
    %509 = vmatpush1.bf16.msra.mxu0 %v395
    %510 = vmatprep.subr.bf16.mxu0 0
    %511 = vmatpush1.bf16.msra.mxu0 %v396
    %512 = vmatprep.subr.bf16.mxu0 0
    %513 = vmatpush1.bf16.msra.mxu0 %v397
    %514 = vmatprep.subr.bf16.mxu0 0
    %515 = vmatpush1.bf16.msra.mxu0 %v398
    %516 = vmatprep.subr.bf16.mxu0 0
    %517 = vmatpush1.bf16.msra.mxu0 %v399
    %518 = vmatprep.mubr.bf16.mxu0 %v77
    %519 = vmatmul.mubr.bf16.gmra.mrb[0].mxu0 %v76
    %v520 = vpop.f32.mrb[0].mxu0
    %v521 = vadd.f32 %v186, %v520
    %v522 = vpop.f32.mrb[0].mxu0
    %v523 = vpop.f32.mrb[0].mxu0
    %v524 = vadd.f32 %v186, %v523
    %v525 = vpop.f32.mrb[0].mxu0
    %526 = vdwg.mxu0
    %527 = vmatprep.subr.bf16.mxu0 0
    %528 = vmatpush1.bf16.msra.mxu0 %v400
    %529 = vmatprep.subr.bf16.mxu0 0
    %530 = vmatpush1.bf16.msra.mxu0 %v401
    %531 = vmatprep.subr.bf16.mxu0 0
    %532 = vmatpush1.bf16.msra.mxu0 %v402
    %533 = vmatprep.subr.bf16.mxu0 0
    %534 = vmatpush1.bf16.msra.mxu0 %v403
    %535 = vmatprep.subr.bf16.mxu0 0
    %536 = vmatpush1.bf16.msra.mxu0 %v404
    %537 = vmatprep.subr.bf16.mxu0 0
    %538 = vmatpush1.bf16.msra.mxu0 %v405
    %539 = vmatprep.subr.bf16.mxu0 0
    %540 = vmatpush1.bf16.msra.mxu0 %v406
    %541 = vmatprep.subr.bf16.mxu0 0
    %542 = vmatpush1.bf16.msra.mxu0 %v407
    %543 = vmatprep.subr.bf16.mxu0 0
    %544 = vmatpush1.bf16.msra.mxu0 %v408
    %545 = vmatprep.subr.bf16.mxu0 0
    %546 = vmatpush1.bf16.msra.mxu0 %v409
    %547 = vmatprep.subr.bf16.mxu0 0
    %548 = vmatpush1.bf16.msra.mxu0 %v410
    %549 = vmatprep.subr.bf16.mxu0 0
    %550 = vmatpush1.bf16.msra.mxu0 %v411
    %551 = vmatprep.subr.bf16.mxu0 0
    %552 = vmatpush1.bf16.msra.mxu0 %v412
    %553 = vmatprep.subr.bf16.mxu0 0
    %554 = vmatpush1.bf16.msra.mxu0 %v413
    %555 = vmatprep.subr.bf16.mxu0 0
    %556 = vmatpush1.bf16.msra.mxu0 %v414
    %557 = vmatprep.subr.bf16.mxu0 0
    %558 = vmatpush1.bf16.msra.mxu0 %v415
    %559 = vmatprep.mubr.bf16.mxu0 %v79
    %560 = vmatmul.mubr.bf16.gmra.mrb[0].mxu0 %v78
    %v561 = vpop.f32.mrb[0].mxu0
    %v562 = vadd.f32 %v521, %v561
    %v563 = vpop.f32.mrb[0].mxu0
    %v564 = vpop.f32.mrb[0].mxu0
    %v565 = vadd.f32 %v524, %v564
    %v566 = vpop.f32.mrb[0].mxu0
    %567 = vdwg.mxu0
    %568 = vmatprep.subr.bf16.mxu0 0
    %569 = vmatpush1.bf16.msra.mxu0 %v416
    %570 = vmatprep.subr.bf16.mxu0 0
    %571 = vmatpush1.bf16.msra.mxu0 %v417
    %572 = vmatprep.subr.bf16.mxu0 0
    %573 = vmatpush1.bf16.msra.mxu0 %v418
    %574 = vmatprep.subr.bf16.mxu0 0
    %575 = vmatpush1.bf16.msra.mxu0 %v419
    %576 = vmatprep.subr.bf16.mxu0 0
    %577 = vmatpush1.bf16.msra.mxu0 %v420
    %578 = vmatprep.subr.bf16.mxu0 0
    %579 = vmatpush1.bf16.msra.mxu0 %v421
    %580 = vmatprep.subr.bf16.mxu0 0
    %581 = vmatpush1.bf16.msra.mxu0 %v422
    %582 = vmatprep.subr.bf16.mxu0 0
    %583 = vmatpush1.bf16.msra.mxu0 %v423
    %584 = vmatprep.subr.bf16.mxu0 0
    %585 = vmatpush1.bf16.msra.mxu0 %v424
    %586 = vmatprep.subr.bf16.mxu0 0
    %587 = vmatpush1.bf16.msra.mxu0 %v425
    %588 = vmatprep.subr.bf16.mxu0 0
    %589 = vmatpush1.bf16.msra.mxu0 %v426
    %590 = vmatprep.subr.bf16.mxu0 0
    %591 = vmatpush1.bf16.msra.mxu0 %v427
    %592 = vmatprep.subr.bf16.mxu0 0
    %593 = vmatpush1.bf16.msra.mxu0 %v428
    %594 = vmatprep.subr.bf16.mxu0 0
    %595 = vmatpush1.bf16.msra.mxu0 %v429
    %596 = vmatprep.subr.bf16.mxu0 0
    %597 = vmatpush1.bf16.msra.mxu0 %v430
    %598 = vmatprep.subr.bf16.mxu0 0
    %599 = vmatpush1.bf16.msra.mxu0 %v431
    %600 = vmatprep.mubr.bf16.mxu0 %v81
    %601 = vmatmul.mubr.bf16.gmra.mrb[0].mxu0 %v80
    %v602 = vpop.f32.mrb[0].mxu0
    %v603 = vadd.f32 %v562, %v602
    %v604 = vpop.f32.mrb[0].mxu0
    %v605 = vpop.f32.mrb[0].mxu0
    %v606 = vadd.f32 %v565, %v605
    %v607 = vpop.f32.mrb[0].mxu0
    %608 = vdwg.mxu0
    %609 = vmatprep.subr.bf16.mxu0 0
    %610 = vmatpush1.bf16.msra.mxu0 %v432
    %611 = vmatprep.subr.bf16.mxu0 0
    %612 = vmatpush1.bf16.msra.mxu0 0
    %613 = vmatprep.subr.bf16.mxu0 0
    %614 = vmatpush1.bf16.msra.mxu0 0
    %615 = vmatprep.subr.bf16.mxu0 0
    %616 = vmatpush1.bf16.msra.mxu0 0
    %617 = vmatprep.subr.bf16.mxu0 0
    %618 = vmatpush1.bf16.msra.mxu0 0
    %619 = vmatprep.subr.bf16.mxu0 0
    %620 = vmatpush1.bf16.msra.mxu0 0
    %621 = vmatprep.subr.bf16.mxu0 0
    %622 = vmatpush1.bf16.msra.mxu0 0
    %623 = vmatprep.subr.bf16.mxu0 0
    %624 = vmatpush1.bf16.msra.mxu0 0
    %625 = vmatprep.subr.bf16.mxu0 0
    %626 = vmatpush1.bf16.msra.mxu0 0
    %627 = vmatprep.subr.bf16.mxu0 0
    %628 = vmatpush1.bf16.msra.mxu0 0
    %629 = vmatprep.subr.bf16.mxu0 0
    %630 = vmatpush1.bf16.msra.mxu0 0
    %631 = vmatprep.subr.bf16.mxu0 0
    %632 = vmatpush1.bf16.msra.mxu0 0
    %633 = vmatprep.subr.bf16.mxu0 0
    %634 = vmatpush1.bf16.msra.mxu0 0
    %635 = vmatprep.subr.bf16.mxu0 0
    %636 = vmatpush1.bf16.msra.mxu0 0
    %637 = vmatprep.subr.bf16.mxu0 0
    %638 = vmatpush1.bf16.msra.mxu0 0
    %639 = vmatprep.subr.bf16.mxu0 0
    %640 = vmatpush1.bf16.msra.mxu0 0
    %641 = vmatprep.mubr.bf16.mxu0 0
    %642 = vmatmul.mubr.bf16.gmra.mrb[0].mxu0 %v484
    %v643 = vpop.f32.mrb[0].mxu0
    %v644 = vadd.f32 %v603, %v643
    %v645 = vpop.f32.mrb[0].mxu0
    %v646 = vpop.f32.mrb[0].mxu0
    %v647 = vadd.f32 %v606, %v646
    %v648 = vpop.f32.mrb[0].mxu0
    %649 = vdwg.mxu0
    %v650 = vmax.f32 %v644, 0.0
    %v651 = vmax.f32 %v647, 0.0
    %v652 = vpack.c.bf16 %v651, %v650
    %v653 = vld [vmem:[#allocation6] sm:$0xf]
    %v654 = vld [vmem:[#allocation6 + $0x4] sm:$0xf]
    %v655 = vld [vmem:[#allocation6 + $0x8] sm:$0xf]
    %v656 = vld [vmem:[#allocation6 + $0xc] sm:$0xf]
    %v657 = vld [vmem:[#allocation6 + $0x10] sm:$0xf]
    %v658 = vld [vmem:[#allocation6 + $0x14] sm:$0xf]
    %v659 = vld [vmem:[#allocation6 + $0x18] sm:$0xf]
    %v660 = vld [vmem:[#allocation6 + $0x1c] sm:$0xf]
    %v661 = vld [vmem:[#allocation6 + $0x20] sm:$0xf]
    %v662 = vld [vmem:[#allocation6 + $0x24] sm:$0xf]
    %v663 = vld [vmem:[#allocation6 + $0x28] sm:$0xf]
    %v664 = vld [vmem:[#allocation6 + $0x2c] sm:$0xf]
    %v665 = vld [vmem:[#allocation6 + $0x30] sm:$0xf]
    %v666 = vld [vmem:[#allocation6 + $0x34] sm:$0xf]
    %v667 = vld [vmem:[#allocation6 + $0x38] sm:$0xf]
    %v668 = vld [vmem:[#allocation6 + $0x3c] sm:$0xf]
    %v669 = vld [vmem:[%s4] sm:$0x1]
    %v671 = vlaneseq
    %v672 = vshrl.u32 %v671, 7
    %v673 = vsub.s32 0, %v672
    %v674 = vrot.slane %v669, %v673
    %v692 = vunpack.c.l.b16 %v653
    %v693 = vunpack.c.l.b16 %v654
    %v694 = vunpack.c.l.b16 %v655
    %v695 = vunpack.c.l.b16 %v656
    %v696 = vunpack.c.l.b16 %v657
    %v697 = vunpack.c.l.b16 %v658
    %v698 = vunpack.c.l.b16 %v659
    %v699 = vunpack.c.l.b16 %v660
    %v700 = vunpack.c.l.b16 %v661
    %v701 = vunpack.c.l.b16 %v662
    %v702 = vunpack.c.l.b16 %v663
    %v703 = vunpack.c.l.b16 %v664
    %v704 = vunpack.c.l.b16 %v665
    %v705 = vunpack.c.l.b16 %v666
    %v706 = vunpack.c.l.b16 %v667
    %v707 = vunpack.c.l.b16 %v668
    %v708 = vpack.c.b16 %v693, %v692
    %v709 = vpack.c.b16 %v695, %v694
    %v710 = vpack.c.b16 %v697, %v696
    %v711 = vpack.c.b16 %v699, %v698
    %v712 = vpack.c.b16 %v701, %v700
    %v713 = vpack.c.b16 %v703, %v702
    %v714 = vpack.c.b16 %v705, %v704
    %v715 = vpack.c.b16 %v707, %v706
    %724 = vmatprep.subr.bf16.mxu0 0
    %725 = vmatpush1.bf16.msra.mxu0 %v708
    %726 = vmatprep.subr.bf16.mxu0 0
    %727 = vmatpush1.bf16.msra.mxu0 %v709
    %728 = vmatprep.subr.bf16.mxu0 0
    %729 = vmatpush1.bf16.msra.mxu0 %v710
    %730 = vmatprep.subr.bf16.mxu0 0
    %731 = vmatpush1.bf16.msra.mxu0 %v711
    %732 = vmatprep.subr.bf16.mxu0 0
    %733 = vmatpush1.bf16.msra.mxu0 %v712
    %734 = vmatprep.subr.bf16.mxu0 0
    %735 = vmatpush1.bf16.msra.mxu0 %v713
    %736 = vmatprep.subr.bf16.mxu0 0
    %737 = vmatpush1.bf16.msra.mxu0 %v714
    %738 = vmatprep.subr.bf16.mxu0 0
    %739 = vmatpush1.bf16.msra.mxu0 %v715
    %740 = vmatprep.subr.bf16.mxu0 0
    %741 = vmatpush1.bf16.msra.mxu0 0
    %742 = vmatprep.subr.bf16.mxu0 0
    %743 = vmatpush1.bf16.msra.mxu0 0
    %744 = vmatprep.subr.bf16.mxu0 0
    %745 = vmatpush1.bf16.msra.mxu0 0
    %746 = vmatprep.subr.bf16.mxu0 0
    %747 = vmatpush1.bf16.msra.mxu0 0
    %748 = vmatprep.subr.bf16.mxu0 0
    %749 = vmatpush1.bf16.msra.mxu0 0
    %750 = vmatprep.subr.bf16.mxu0 0
    %751 = vmatpush1.bf16.msra.mxu0 0
    %752 = vmatprep.subr.bf16.mxu0 0
    %753 = vmatpush1.bf16.msra.mxu0 0
    %754 = vmatprep.subr.bf16.mxu0 0
    %755 = vmatpush1.bf16.msra.mxu0 0
    %756 = vmatprep.mubr.bf16.mxu0 0
    %757 = vmatmul.mubr.bf16.gmra.mrb[0].mxu0 %v652
    %v758 = vpop.f32.mrb[0].mxu0
    %v759 = vadd.f32 %v674, %v758
    %v760 = vpop.f32.mrb[0].mxu0
    %v761 = vpop.f32.mrb[0].mxu0
    %v762 = vadd.f32 %v674, %v761
    %v763 = vpop.f32.mrb[0].mxu0
    %764 = vdwg.mxu0
    %v765 = vpack.c.bf16 %v762, %v759
    %v767 = vunpack.c.l.b16 %v765
    %v768 = vunpack.c.h.b16 %v765
    %v769 = vpack.c.b16 %v767, %v767
    %v770 = vpack.c.b16 %v768, %v768
    %773 = vst [vmem:[#allocation7] sm:$0xf] %v769
    %774 = vst [vmem:[#allocation7 + $0x4] sm:$0xf] %v770
    // Predicated region
    $region34: #{net_forward.1} parent=1 // pred_check
      _
    $region35: #{net_forward.1} parent=1 // pred_check_branch
      %776 = sbr.rel (0) target = $region37
    $region36: #{net_forward.1} parent=1 // pred_region
      // Predicated region
      $region38: #{net_forward.1} parent=36 // pred_check
        _
      $region39: #{net_forward.1} parent=36 // pred_check_branch
        %778 = sbr.rel (0) target = $region41
      $region40: #{net_forward.1} parent=36 // pred_region
        // Predicated region
        $region42: #{net_forward.1} parent=40 // pred_check
          _
        $region43: #{net_forward.1} parent=40 // pred_check_branch
          %780 = sbr.rel target = $region45
        $region44: #{net_forward.1} parent=40 // pred_region
          // Predicated region
          $region57: #{net_forward.1} parent=44 // pred_check
            _
          $region58: #{net_forward.1} parent=44 // pred_check_branch
            %795 = sbr.rel (0) target = $region60
          $region59: #{net_forward.1} parent=44 // pred_region
            loop: start=0, step=1, limit=1
            $region61: #{net_forward.1} parent=59 // loop_pre_header
              _
            $region62: #{net_forward.1} parent=59 // loop_header
              %s798 = sphi 0, %s802
              %p799 = scmp.ge.s32.totalorder %s798, 1
              %s803 = sphi [#allocation7], [#allocation7]
              %s804 = sphi %s5, %s5
            $region63: #{net_forward.1} parent=59 // loop_header_branch
              %801 = sbr.rel (%p799) target = $region67
            $region64: #{net_forward.1} parent=59 // loop_body
              %v805 = vld [vmem:[%s803] sm:$0xf]
              %806 = vst [vmem:[%s804] sm:$0xf] %v805
            $region65: #{net_forward.1} parent=59 // loop_footer
              %s802 = sadd.s32 1, %s798
            $region66: #{net_forward.1} parent=59 // loop_footer_branch
              %797 = sbr.rel target = $region62
            $region67: #{net_forward.1} parent=59 // loop_exit
              _
          $region60: #{net_forward.1} parent=44 // pred_fallthru
            _
        $region45: #{net_forward.1} parent=40 // pred_fallthru
          _
        // Predicated region
        $region46: #{net_forward.1} parent=40 // pred_check
          _
        $region47: #{net_forward.1} parent=40 // pred_check_branch
          %782 = sbr.rel (0) target = $region49
        $region48: #{net_forward.1} parent=40 // pred_region
          loop: start=0, step=1, limit=1
          $region50: #{net_forward.1} parent=48 // loop_pre_header
            _
          $region51: #{net_forward.1} parent=48 // loop_header
            %s785 = sphi 0, %s789
            %p786 = scmp.ge.s32.totalorder %s785, 1
            %s790 = sphi [#allocation7], [#allocation7]
            %s791 = sphi %s5, %s5
          $region52: #{net_forward.1} parent=48 // loop_header_branch
            %788 = sbr.rel (%p786) target = $region56
          $region53: #{net_forward.1} parent=48 // loop_body
            %v792 = vld [vmem:[%s790] sm:$0xf]
            %793 = vst [vmem:[%s791] sm:$0xf] %v792
          $region54: #{net_forward.1} parent=48 // loop_footer
            %s789 = sadd.s32 1, %s785
          $region55: #{net_forward.1} parent=48 // loop_footer_branch
            %784 = sbr.rel target = $region51
          $region56: #{net_forward.1} parent=48 // loop_exit
            _
        $region49: #{net_forward.1} parent=40 // pred_fallthru
          _
      $region41: #{net_forward.1} parent=36 // pred_fallthru
        _
      %807 = vnop
    $region37: #{net_forward.1} parent=1 // pred_fallthru
      _
    // Predicated region
    $region68: #{net_forward.1} parent=1 // pred_check
      _
    $region69: #{net_forward.1} parent=1 // pred_check_branch
      %809 = sbr.rel (0) target = $region71
    $region70: #{net_forward.1} parent=1 // pred_region
      _
    $region71: #{net_forward.1} parent=1 // pred_fallthru
      _
    %810 = vsyncpa [#allocation3], 1
    %811 = vsyncpa [#allocation5], 1

</llo_original>
